<compile_context>
chip_gen: v7x
topology: tpu7x:2x2x1
jax: 0.10.0
libtpu: 0.0.40
codegen_flags: <defaults>
</compile_context>

<pallas_src>
import math

import jax
import jax.numpy as jnp
from jax.experimental import pallas as pl
from jax.experimental.pallas import tpu as pltpu


_A = math.sqrt(2.0 / math.pi)      # sqrt(2/pi)
_B = _A * 0.044715                 # folded coefficient: A * 0.044715

_WIDTH_CANDIDATES = (2048, 1024, 512, 256, 128)
_DEFAULT_BLOCK_BYTES = 8 * 1024 * 1024
_MIN_GRID_STEPS = 4


def _gelu_kernel(x_ref, o_ref):
    # Compute in f32 for accuracy (matches the PyTorch math); cast on store.
    xf = x_ref[...].astype(jnp.float32)
    # Horner form: sqrt(2/pi) * (x + c*x^3) == x * (A + B*x^2)
    inner = xf * (_A + _B * (xf * xf))
    o_ref[...] = (0.5 * xf * (1.0 + jnp.tanh(inner))).astype(o_ref.dtype)


def _gelu_ref(x):
    """Pure-XLA reference / ragged-tail path (single fused elementwise pass)."""
    xf = x.astype(jnp.float32)
    y = 0.5 * xf * (1.0 + jnp.tanh(_A * (xf + 0.044715 * xf ** 3)))
    return y.astype(x.dtype)


def _vmem_capacity_bytes() -> int:
    """Best-effort physical VMEM query; conservative fallback if unavailable."""
    try:
        get_info = getattr(pltpu, "get_tpu_info", None)
        if get_info is not None:
            cap = getattr(get_info(), "vmem_capacity_bytes", None)
            if cap:
                return int(cap)
    except Exception:
        pass
    # Fallback: assume 128 MiB; the 8 MiB default block still fits v7x's 64 MiB
    # once double-buffered (4 x 8 MiB = 32 MiB) with the explicit vmem limit.
    return 128 * 1024 * 1024


def _pick_width(n: int, sub: int) -> int:
    """Widest lane-dense width dividing n that still leaves enough rows."""
    divisors = [w for w in _WIDTH_CANDIDATES if n % w == 0]
    for w in divisors:                       # enough rows for >=4 grid steps
        if n // w >= _MIN_GRID_STEPS * sub:
            return w
    for w in divisors:                       # at least one full sublane group
        if n // w >= sub:
            return w
    return divisors[-1]


def _pick_block_rows(rows: int, width: int, itemsize: int,
                     block_bytes: int, sub: int) -> int:
    bytes_per_row = width * itemsize
    target = max(sub, (block_bytes // bytes_per_row) // sub * sub)
    # Guarantee >= ~4 grid steps when the array is big enough so the
    # "parallel" axis shards across v7x's two TensorCores and the DMA
    # pipeline actually overlaps with compute.
    if rows >= _MIN_GRID_STEPS * sub:
        per_step = -(-rows // _MIN_GRID_STEPS)      # ceil(rows / 4)
        per_step = -(-per_step // sub) * sub        # round up to sublane group
        target = min(target, per_step)
    block_rows = min(target, rows)
    if block_rows != rows:
        # (8,128) rule: non-full second-minor block dim must pack sublanes.
        block_rows = max(sub, (block_rows // sub) * sub)
    return block_rows


def _gelu_slab(x2d: jax.Array, block_bytes: int, sub: int, vmem_cap: int) -> jax.Array:
    rows, width = x2d.shape
    itemsize = jnp.dtype(x2d.dtype).itemsize
    n = rows * width

    block_rows = _pick_block_rows(rows, width, itemsize, block_bytes, sub)
    block_b = block_rows * width * itemsize
    # in + out, double-buffered -> ~4 live blocks; 4.5x + slack covers scratch.
    vmem_limit = int(min(max(4.5 * block_b + (1 << 20), 8 << 20),
                         vmem_cap * 7 // 8))
    grid = (pl.cdiv(rows, block_rows),)

    return pl.pallas_call(
        _gelu_kernel,
        out_shape=jax.ShapeDtypeStruct((rows, width), x2d.dtype),
        grid_spec=pltpu.PrefetchScalarGridSpec(
            num_scalar_prefetch=0,
            grid=grid,
            in_specs=[pl.BlockSpec((block_rows, width), lambda i: (i, 0))],
            out_specs=pl.BlockSpec((block_rows, width), lambda i: (i, 0)),
        ),
        compiler_params=pltpu.CompilerParams(
            dimension_semantics=("parallel",),
            vmem_limit_bytes=vmem_limit,
        ),
        cost_estimate=pl.CostEstimate(
            flops=7 * n,
            transcendentals=n,
            bytes_accessed=2 * n * itemsize,
        ),
    )(x2d)


def gelu(x: jax.Array, *, block_bytes: int | None = None) -> jax.Array:
    """Tanh-approximate GELU, elementwise, any float shape/dtype."""
    orig_shape = x.shape
    n = x.size
    if n == 0:
        return x
    itemsize = jnp.dtype(x.dtype).itemsize
    sub = 8 * max(1, 4 // itemsize)          # sublane packing: f32 8, bf16 16

    vmem_cap = _vmem_capacity_bytes()
    if block_bytes is None:
        block_bytes = _DEFAULT_BLOCK_BYTES
    # Keep 4 double-buffered blocks within ~3/4 of physical VMEM (v7x: 64 MiB).
    block_bytes = max(sub * 128 * itemsize,
                      min(block_bytes, (vmem_cap * 3 // 4) // 4))

    x_flat = x.reshape(-1)                   # free (bitcast) for default layout

    if n % 128 == 0:
        # Fast path: no padding, no slicing — exactly one HBM read + write.
        width = _pick_width(n, sub)
        out2d = _gelu_slab(x_flat.reshape(n // width, width),
                           block_bytes, sub, vmem_cap)
        return out2d.reshape(orig_shape)

    # Ragged path: kernel on the 128-aligned prefix, <128-element tail in XLA.
    # (No full-array pad + slice passes any more.)
    width = 128
    rows = n // width
    if rows == 0:
        return _gelu_ref(x)                  # tiny array: one fused XLA pass
    n_main = rows * width
    y_main = _gelu_slab(x_flat[:n_main].reshape(rows, width),
                        block_bytes, sub, vmem_cap).reshape(-1)
    y_tail = _gelu_ref(x_flat[n_main:])
    return jnp.concatenate([y_main, y_tail]).reshape(orig_shape)


if __name__ == "__main__":
    key = jax.random.PRNGKey(0)
    # NCHW input, small shape consistent with a conv-net activation.
    x = jax.random.normal(key, (2, 4, 16, 16), dtype=jnp.float32)

    y = gelu(x)
    jax.block_until_ready(y)

    y_ref = _gelu_ref(x)
    assert y.shape == x.shape and y.dtype == x.dtype
    assert jnp.allclose(y, y_ref, atol=1e-5, rtol=1e-5), "mismatch vs reference"

    # Extra checks: (a) non-128-aligned size (prefix + XLA-tail path),
    #               (b) multi-block bf16 slab (multiple grid steps).
    for shape, dt in (((3, 5, 7, 11), jnp.float32),
                      ((2, 16, 256, 256), jnp.bfloat16)):
        xi = jax.random.normal(jax.random.PRNGKey(1), shape, dtype=dt)
        yi = gelu(xi)
        jax.block_until_ready(yi)
        ri = _gelu_ref(xi)
        assert yi.shape == xi.shape and yi.dtype == xi.dtype
        atol = 2e-2 if dt == jnp.bfloat16 else 1e-5
        assert jnp.allclose(yi.astype(jnp.float32), ri.astype(jnp.float32),
                            atol=atol, rtol=1e-2), f"mismatch for {shape} {dt}"

    print("KERNEL_OK")
</pallas_src>

<mosaic_0001>
module attributes {stable_mosaic.version = 11 : i64} {
  func.func @_gelu_kernel(%arg0: i32, %arg1: memref<8x256xf32, #tpu.memory_space<vmem>>, %arg2: memref<8x256xf32, #tpu.memory_space<vmem>>) attributes {dimension_semantics = [#tpu.dimension_semantics<parallel>], iteration_bounds = array<i64: 1>, scalar_prefetch = 0 : i64, scratch_operands = 0 : i64, tpu.core_type = #tpu.core_type<tc>, window_params = [{transform_indices = @transform_0, window_bounds = array<i64: 8, 256>}, {transform_indices = @transform_1, window_bounds = array<i64: 8, 256>}]} {
    %c0 = arith.constant 0 : index
    %c0_0 = arith.constant 0 : index
    %0 = vector.load %arg1[%c0, %c0_0] : memref<8x256xf32, #tpu.memory_space<vmem>>, vector<8x256xf32>
    %1 = arith.mulf %0, %0 : vector<8x256xf32>
    %cst = arith.constant 0.0356774069 : f32
    %2 = vector.broadcast %cst : f32 to vector<8x256xf32>
    %3 = arith.mulf %2, %1 : vector<8x256xf32>
    %cst_1 = arith.constant 0.797884583 : f32
    %4 = vector.broadcast %cst_1 : f32 to vector<8x256xf32>
    %5 = arith.addf %4, %3 : vector<8x256xf32>
    %6 = arith.mulf %0, %5 : vector<8x256xf32>
    %cst_2 = arith.constant 5.000000e-01 : f32
    %7 = vector.broadcast %cst_2 : f32 to vector<8x256xf32>
    %8 = arith.mulf %7, %0 : vector<8x256xf32>
    %9 = math.tanh %6 : vector<8x256xf32>
    %cst_3 = arith.constant 1.000000e+00 : f32
    %10 = vector.broadcast %cst_3 : f32 to vector<8x256xf32>
    %11 = arith.addf %10, %9 : vector<8x256xf32>
    %12 = arith.mulf %8, %11 : vector<8x256xf32>
    %c0_4 = arith.constant 0 : index
    %c0_5 = arith.constant 0 : index
    %13 = vector.load %arg2[%c0_4, %c0_5] : memref<8x256xf32, #tpu.memory_space<vmem>>, vector<8x256xf32>
    tpu.vector_store %arg2[%c0_4, %c0_5], %12 {strides = array<i32>} : memref<8x256xf32, #tpu.memory_space<vmem>>, vector<8x256xf32>,
    return
  }
  func.func @transform_0(%arg0: i32) -> (i32, i32) {
    %c0_i32 = arith.constant 0 : i32
    %c0_i32_0 = arith.constant 0 : i32
    return %arg0, %c0_i32 : i32, i32
  }
  func.func @transform_1(%arg0: i32) -> (i32, i32) {
    %c0_i32 = arith.constant 0 : i32
    %c0_i32_0 = arith.constant 0 : i32
    return %arg0, %c0_i32 : i32, i32
  }
}

</mosaic_0001>

<llo_original>
// kernel: tpu_custom_call.1
$region0: #{tpu_custom_call.1}
  #allocation0 [shape = 'u32[]', space=smem, size = 0x4, offset = 0x4, fixed_abs, tag = 'smem constant byte address 0x4 - core index']
  #allocation1 [shape = 'u32[144,128]{1,0:T(1,128)}', space=vmem, size = 0x12000, scoped, tag = 'internal scratch']
  %s0 = inlined_call_operand.hbm [shape: f32[8,256], index: 0, kind: input, shape index: {}]
  %s1 = inlined_call_operand.hbm [shape: f32[8,256], index: 1, kind: output, shape index: {}]
  %s2 = sld [smem:[#allocation0]]
  $region18: #{tpu_custom_call.1} parent=0
    _
  %s4 = ssub.s32 1, %s2
  %s5 = scalar_select 0, %s4, %s2
  $region1: #{tpu_custom_call.1} parent=0
    #allocation2 [shape = 'u8[8192]{0}', space=vmem, size = 0x2000, scoped, tag = 'input window, operand 0, single buffered']
    #allocation3 [shape = 's32[1]{0}', space=sflag, size = 0x4, scoped, tag = 'scoped memory for tpu_custom_call.1']
    #allocation4 [shape = 's32[1]{0}', space=sflag, size = 0x4, scoped, tag = 'scoped memory for tpu_custom_call.1']
    #allocation5 [shape = 'u8[8192]{0}', space=vmem, size = 0x2000, scoped, tag = 'output window, operand 0, single buffered']
    %6 = vsyncpa [#allocation3], 0
    %7 = vsyncpa [#allocation4], 0
    // Predicated region
    $region2: #{tpu_custom_call.1} parent=1 // pred_check
      _
    $region3: #{tpu_custom_call.1} parent=1 // pred_check_branch
      %9 = sbr.rel (0) target = $region5
    $region4: #{tpu_custom_call.1} parent=1 // pred_region
      %s11 = ssub.s32 256, 256
      %12 = vsyncadd [#allocation3], %s11
      %s14 = sshll.u32 [#allocation2], 4
      %s15 = int_to_ptr.vmem [resolvable:$true] %s14
      %17 = dma.hbm_to_vmem [thread:$0]  %s0, 256, %s15, [#allocation3]
    $region5: #{tpu_custom_call.1} parent=1 // pred_fallthru
      _
    // Predicated region
    $region6: #{tpu_custom_call.1} parent=1 // pred_check
      _
    $region7: #{tpu_custom_call.1} parent=1 // pred_check_branch
      %19 = sbr.rel (0) target = $region9
    $region8: #{tpu_custom_call.1} parent=1 // pred_region
      %20 = dma.done [#allocation3], 256
    $region9: #{tpu_custom_call.1} parent=1 // pred_fallthru
      _
    %v21 = vld [vmem:[#allocation2] sm:$0xff]
    %v22 = vld [vmem:[#allocation2 + $0x8] sm:$0xff]
    %v23 = vmul.f32 %v21, %v21
    %v24 = vmul.f32 %v22, %v22
    %v25 = vmul.f32 %v23, 0.035677407
    %v26 = vmul.f32 %v24, 0.035677407
    %v27 = vadd.f32 %v25, 0.7978846
    %v28 = vadd.f32 %v26, 0.7978846
    %v29 = vmul.f32 %v21, %v27
    %v30 = vmul.f32 %v22, %v28
    %v31 = vmul.f32 %v21, 0.5
    %v32 = vmul.f32 %v22, 0.5
    %v33 = vtanh.pop %v29
    %v34 = vtanh.pop %v30
    %v35 = vadd.f32 %v33, 1.0
    %v36 = vadd.f32 %v34, 1.0
    %v37 = vmul.f32 %v31, %v35
    %v38 = vmul.f32 %v32, %v36
    %39 = vst [vmem:[#allocation5] sm:$0xff] %v37
    %40 = vst [vmem:[#allocation5 + $0x8] sm:$0xff] %v38
    // Predicated region
    $region10: #{tpu_custom_call.1} parent=1 // pred_check
      _
    $region11: #{tpu_custom_call.1} parent=1 // pred_check_branch
      %42 = sbr.rel (0) target = $region13
    $region12: #{tpu_custom_call.1} parent=1 // pred_region
      %s44 = ssub.s32 256, 256
      %45 = vsyncadd [#allocation4], %s44
      %s47 = sshll.u32 [#allocation5], 4
      %s48 = int_to_ptr.vmem [resolvable:$true] %s47
      %50 = dma.vmem_to_hbm [thread:$0]  %s48, 256, %s1, [#allocation4]
    $region13: #{tpu_custom_call.1} parent=1 // pred_fallthru
      _
    // Predicated region
    $region14: #{tpu_custom_call.1} parent=1 // pred_check
      _
    $region15: #{tpu_custom_call.1} parent=1 // pred_check_branch
      %52 = sbr.rel (0) target = $region17
    $region16: #{tpu_custom_call.1} parent=1 // pred_region
      %53 = dma.done [#allocation4], 256
    $region17: #{tpu_custom_call.1} parent=1 // pred_fallthru
      _
    %54 = vsyncpa [#allocation3], 1
    %55 = vsyncpa [#allocation4], 1

</llo_original>
